<compile_context>
chip_gen: v7x
topology: tpu7x:2x2x1
jax: 0.10.0
libtpu: 0.0.40
codegen_flags: <defaults>
</compile_context>

<pallas_src>
import functools

import jax
import jax.numpy as jnp
from jax.experimental import pallas as pl
from jax.experimental.pallas import tpu as pltpu

_LANE = 128     # lane width: last dim multiples of 128 -> unmasked stores / full vregs
_SUBLANE = 8    # sublane width for f32


def _round_up(x, m):
    return ((x + m - 1) // m) * m


def _pad2d(a, rows, cols):
    r, c = a.shape
    return jnp.pad(a, ((0, rows - r), (0, cols - c)))


def _fused_mlp_kernel(*refs, num_hidden: int):
    """refs = (x_ref, w0, b0, ..., w_{N-1}, b_{N-1}, w_out, b_out, o_ref).

    Chains all layers in-register / in-VMEM: [Linear + ReLU]*num_hidden -> Linear.
    """
    x_ref = refs[0]
    o_ref = refs[-1]
    param_refs = refs[1:-1]

    h = x_ref[...]
    for layer in range(num_hidden + 1):
        w_ref = param_refs[2 * layer]
        b_ref = param_refs[2 * layer + 1]
        h = jnp.dot(h, w_ref[...], preferred_element_type=jnp.float32) + b_ref[...]
        if layer < num_hidden:          # hidden layers: ReLU; output layer: none
            h = jnp.maximum(h, 0.0)
    o_ref[...] = h.astype(o_ref.dtype)


def make_fused_mlp(hidden_params, output_params):
    """Builds a jitted forward(x) for the whole MLP as a single Pallas kernel.

    hidden_params: list of (W:(Din,Dout) f32, b:(1,Dout) f32)
    output_params: (W_out:(Din,Dout_final), b_out:(1,Dout_final))
    """
    params = list(hidden_params) + [output_params]
    num_hidden = len(hidden_params)
    logical_out = output_params[0].shape[1]

    # Zero-pad every feature dimension up to a multiple of 128 ONCE, at build time.
    padded = []
    for w, b in params:
        din, dout = w.shape
        din_p, dout_p = _round_up(din, _LANE), _round_up(dout, _LANE)
        padded.append((_pad2d(w, din_p, dout_p), _pad2d(b, 1, dout_p)))

    in_pad = padded[0][0].shape[0]
    out_pad = padded[-1][0].shape[1]

    flat_params = []
    for w, b in padded:
        flat_params += [w, b]

    kernel = functools.partial(_fused_mlp_kernel, num_hidden=num_hidden)

    # TODO(synk): if batch / layer widths are scaled up, add a batch-tiled "parallel"
    # grid axis (TM multiple of 8) so work shards across v7x's 2 TensorCores, and
    # re-derive weight tiling for the 64 MiB VMEM budget.
    @jax.jit
    def forward(x):
        batch, din = x.shape
        bpad = _round_up(batch, _SUBLANE)
        xp = jnp.pad(x, ((0, bpad - batch), (0, in_pad - din)))

        flops = sum(2 * bpad * w.shape[0] * w.shape[1] for w, _ in padded)
        bytes_accessed = (
            bpad * in_pad * 4
            + sum(w.size * 4 + b.size * 4 for w, b in padded)
            + bpad * out_pad * 4
        )

        out_padded = pl.pallas_call(
            kernel,
            out_shape=jax.ShapeDtypeStruct((bpad, out_pad), x.dtype),
            in_specs=[pl.BlockSpec(memory_space=pltpu.MemorySpace.VMEM)]
            * (1 + len(flat_params)),
            out_specs=pl.BlockSpec(memory_space=pltpu.MemorySpace.VMEM),
            cost_estimate=pl.CostEstimate(
                flops=flops, transcendentals=0, bytes_accessed=bytes_accessed
            ),
        )(xp, *flat_params)

        return out_padded[:batch, :logical_out]

    return forward


def init_params(key, input_size, output_size, hidden_sizes):
    """Deterministic PyTorch-style uniform(-1/sqrt(fan_in), 1/sqrt(fan_in)) init.

    Bias is stored as (1, Dout) so the kernel never reshapes per call.
    """
    hidden = []
    sizes = [input_size] + list(hidden_sizes)
    for idx in range(len(hidden_sizes)):
        fan_in, fan_out = sizes[idx], sizes[idx + 1]
        key, kw, kb = jax.random.split(key, 3)
        bound = 1.0 / jnp.sqrt(jnp.float32(fan_in))
        w = jax.random.uniform(kw, (fan_in, fan_out), jnp.float32, -bound, bound)
        b = jax.random.uniform(kb, (1, fan_out), jnp.float32, -bound, bound)
        hidden.append((w, b))
    # output layer (no activation; module's `activation` arg is None by default)
    fan_in = sizes[-1]
    key, kw, kb = jax.random.split(key, 3)
    bound = 1.0 / jnp.sqrt(jnp.float32(fan_in))
    w_out = jax.random.uniform(kw, (fan_in, output_size), jnp.float32, -bound, bound)
    b_out = jax.random.uniform(kb, (1, output_size), jnp.float32, -bound, bound)
    return hidden, (w_out, b_out)


if __name__ == "__main__":
    key = jax.random.PRNGKey(0)
    batch = 8
    input_size = 32
    hidden_sizes = (64, 32)   # the *args of DeepNeuralNetwork
    output_size = 16

    key, kx = jax.random.split(key)
    x = jax.random.normal(kx, (batch, input_size), jnp.float32)

    hidden_params, output_params = init_params(key, input_size, output_size, hidden_sizes)

    forward = make_fused_mlp(hidden_params, output_params)
    out = forward(x)
    out = jax.block_until_ready(out)

    # reference check in plain JAX (unpadded params)
    ref = x
    for w, b in hidden_params:
        ref = jnp.maximum(ref @ w + b, 0.0)
    w_out, b_out = output_params
    ref = ref @ w_out + b_out

    assert out.shape == (batch, output_size)
    assert jnp.allclose(out, ref, atol=1e-5, rtol=1e-5)

    print("KERNEL_OK")
</pallas_src>

<mosaic_0001>
module attributes {stable_mosaic.version = 11 : i64} {
  func.func @_fused_mlp_kernel(%arg0: memref<8x128xf32, #tpu.memory_space<vmem>>, %arg1: memref<128x128xf32, #tpu.memory_space<vmem>>, %arg2: memref<1x128xf32, #tpu.memory_space<vmem>>, %arg3: memref<128x128xf32, #tpu.memory_space<vmem>>, %arg4: memref<1x128xf32, #tpu.memory_space<vmem>>, %arg5: memref<128x128xf32, #tpu.memory_space<vmem>>, %arg6: memref<1x128xf32, #tpu.memory_space<vmem>>, %arg7: memref<8x128xf32, #tpu.memory_space<vmem>>) attributes {dimension_semantics = [], scalar_prefetch = 0 : i64, scratch_operands = 0 : i64, tpu.core_type = #tpu.core_type<tc>} {
    %c0 = arith.constant 0 : index
    %c0_0 = arith.constant 0 : index
    %0 = vector.load %arg0[%c0, %c0_0] : memref<8x128xf32, #tpu.memory_space<vmem>>, vector<8x128xf32>
    %c0_1 = arith.constant 0 : index
    %c0_2 = arith.constant 0 : index
    %1 = vector.load %arg1[%c0_1, %c0_2] : memref<128x128xf32, #tpu.memory_space<vmem>>, vector<128x128xf32>
    %cst = arith.constant dense<0.000000e+00> : vector<8x128xf32>
    %2 = tpu.matmul %0, %1, %cst {dimension_numbers = #tpu.dot_dimension_numbers<[1], [0], [0], [1], [0, 0, 1, 1], [], []>} : vector<8x128xf32>, vector<128x128xf32>, vector<8x128xf32> -> vector<8x128xf32>
    %c0_3 = arith.constant 0 : index
    %c0_4 = arith.constant 0 : index
    %3 = vector.load %arg2[%c0_3, %c0_4] : memref<1x128xf32, #tpu.memory_space<vmem>>, vector<1x128xf32>
    %4 = vector.broadcast %3 : vector<1x128xf32> to vector<8x128xf32>
    %5 = arith.addf %2, %4 : vector<8x128xf32>
    %cst_5 = arith.constant 0.000000e+00 : f32
    %6 = vector.broadcast %cst_5 : f32 to vector<8x128xf32>
    %7 = arith.maximumf %5, %6 : vector<8x128xf32>
    %c0_6 = arith.constant 0 : index
    %c0_7 = arith.constant 0 : index
    %8 = vector.load %arg3[%c0_6, %c0_7] : memref<128x128xf32, #tpu.memory_space<vmem>>, vector<128x128xf32>
    %cst_8 = arith.constant dense<0.000000e+00> : vector<8x128xf32>
    %9 = tpu.matmul %7, %8, %cst_8 {dimension_numbers = #tpu.dot_dimension_numbers<[1], [0], [0], [1], [0, 0, 1, 1], [], []>} : vector<8x128xf32>, vector<128x128xf32>, vector<8x128xf32> -> vector<8x128xf32>
    %c0_9 = arith.constant 0 : index
    %c0_10 = arith.constant 0 : index
    %10 = vector.load %arg4[%c0_9, %c0_10] : memref<1x128xf32, #tpu.memory_space<vmem>>, vector<1x128xf32>
    %11 = vector.broadcast %10 : vector<1x128xf32> to vector<8x128xf32>
    %12 = arith.addf %9, %11 : vector<8x128xf32>
    %cst_11 = arith.constant 0.000000e+00 : f32
    %13 = vector.broadcast %cst_11 : f32 to vector<8x128xf32>
    %14 = arith.maximumf %12, %13 : vector<8x128xf32>
    %c0_12 = arith.constant 0 : index
    %c0_13 = arith.constant 0 : index
    %15 = vector.load %arg5[%c0_12, %c0_13] : memref<128x128xf32, #tpu.memory_space<vmem>>, vector<128x128xf32>
    %cst_14 = arith.constant dense<0.000000e+00> : vector<8x128xf32>
    %16 = tpu.matmul %14, %15, %cst_14 {dimension_numbers = #tpu.dot_dimension_numbers<[1], [0], [0], [1], [0, 0, 1, 1], [], []>} : vector<8x128xf32>, vector<128x128xf32>, vector<8x128xf32> -> vector<8x128xf32>
    %c0_15 = arith.constant 0 : index
    %c0_16 = arith.constant 0 : index
    %17 = vector.load %arg6[%c0_15, %c0_16] : memref<1x128xf32, #tpu.memory_space<vmem>>, vector<1x128xf32>
    %18 = vector.broadcast %17 : vector<1x128xf32> to vector<8x128xf32>
    %19 = arith.addf %16, %18 : vector<8x128xf32>
    %c0_17 = arith.constant 0 : index
    %c0_18 = arith.constant 0 : index
    %20 = vector.load %arg7[%c0_17, %c0_18] : memref<8x128xf32, #tpu.memory_space<vmem>>, vector<8x128xf32>
    tpu.vector_store %arg7[%c0_17, %c0_18], %19 {strides = array<i32>} : memref<8x128xf32, #tpu.memory_space<vmem>>, vector<8x128xf32>,
    return
  }
}

</mosaic_0001>

<llo_original>
// kernel: forward.1
$region0: #{forward.1}
  #allocation0 [shape = 'u32[]', space=smem, size = 0x4, offset = 0x4, fixed_abs, tag = 'smem constant byte address 0x4 - core index']
  #allocation1 [shape = 'u32[144,128]{1,0:T(1,128)}', space=vmem, size = 0x12000, scoped, tag = 'internal scratch']
  %s0 = inlined_call_operand.vmem [shape: f32[8,128], index: 0, kind: input, shape index: {}]
  %s1 = inlined_call_operand.hbm [shape: f32[128,128], index: 1, kind: input, shape index: {}]
  %s2 = inlined_call_operand.vmem [shape: f32[1,128], index: 2, kind: input, shape index: {}]
  %s3 = inlined_call_operand.hbm [shape: f32[128,128], index: 3, kind: input, shape index: {}]
  %s4 = inlined_call_operand.vmem [shape: f32[1,128], index: 4, kind: input, shape index: {}]
  %s5 = inlined_call_operand.hbm [shape: f32[128,128], index: 5, kind: input, shape index: {}]
  %s6 = inlined_call_operand.vmem [shape: f32[1,128], index: 6, kind: input, shape index: {}]
  %s7 = inlined_call_operand.hbm [shape: f32[8,128], index: 7, kind: output, shape index: {}]
  %s8 = sld [smem:[#allocation0]]
  $region50: #{forward.1} parent=0
    _
  %s10 = ssub.s32 1, %s8
  %s11 = scalar_select 0, %s10, %s8
  $region1: #{forward.1} parent=0
    #allocation2 [shape = 'u8[65536]{0}', space=vmem, size = 0x10000, scoped, tag = 'input window, operand 1, single buffered']
    #allocation3 [shape = 's32[1]{0}', space=sflag, size = 0x4, scoped, tag = 'scoped memory for forward.1']
    #allocation4 [shape = 's32[1]{0}', space=sflag, size = 0x4, scoped, tag = 'scoped memory for forward.1']
    #allocation5 [shape = 'u8[65536]{0}', space=vmem, size = 0x10000, scoped, tag = 'input window, operand 3, single buffered']
    #allocation6 [shape = 's32[1]{0}', space=sflag, size = 0x4, scoped, tag = 'scoped memory for forward.1']
    #allocation7 [shape = 'u8[65536]{0}', space=vmem, size = 0x10000, scoped, tag = 'input window, operand 5, single buffered']
    #allocation8 [shape = 'u8[4096]{0}', space=vmem, size = 0x1000, scoped, tag = 'output window, operand 0, single buffered']
    %12 = vsyncpa [#allocation3], 0
    %13 = vsyncpa [#allocation6], 0
    %14 = vsyncpa [#allocation4], 0
    // Predicated region
    $region2: #{forward.1} parent=1 // pred_check
      _
    $region3: #{forward.1} parent=1 // pred_check_branch
      %16 = sbr.rel (0) target = $region5
    $region4: #{forward.1} parent=1 // pred_region
      _
    $region5: #{forward.1} parent=1 // pred_fallthru
      _
    // Predicated region
    $region6: #{forward.1} parent=1 // pred_check
      _
    $region7: #{forward.1} parent=1 // pred_check_branch
      %18 = sbr.rel (0) target = $region9
    $region8: #{forward.1} parent=1 // pred_region
      %s20 = ssub.s32 2048, 2048
      %21 = vsyncadd [#allocation3], %s20
      %s22 = sshll.u32 [#allocation2], 4
      %s23 = int_to_ptr.vmem [resolvable:$true] %s22
      %28 = dma.hbm_to_vmem [thread:$0]  %s1, 2048, %s23, [#allocation3], 128, 128, 8
    $region9: #{forward.1} parent=1 // pred_fallthru
      _
    // Predicated region
    $region10: #{forward.1} parent=1 // pred_check
      _
    $region11: #{forward.1} parent=1 // pred_check_branch
      %30 = sbr.rel (0) target = $region13
    $region12: #{forward.1} parent=1 // pred_region
      _
    $region13: #{forward.1} parent=1 // pred_fallthru
      _
    // Predicated region
    $region14: #{forward.1} parent=1 // pred_check
      _
    $region15: #{forward.1} parent=1 // pred_check_branch
      %32 = sbr.rel (0) target = $region17
    $region16: #{forward.1} parent=1 // pred_region
      %s34 = ssub.s32 2048, 2048
      %35 = vsyncadd [#allocation6], %s34
      %s36 = sshll.u32 [#allocation5], 4
      %s37 = int_to_ptr.vmem [resolvable:$true] %s36
      %42 = dma.hbm_to_vmem [thread:$0]  %s3, 2048, %s37, [#allocation6], 128, 128, 8
    $region17: #{forward.1} parent=1 // pred_fallthru
      _
    // Predicated region
    $region18: #{forward.1} parent=1 // pred_check
      _
    $region19: #{forward.1} parent=1 // pred_check_branch
      %44 = sbr.rel (0) target = $region21
    $region20: #{forward.1} parent=1 // pred_region
      _
    $region21: #{forward.1} parent=1 // pred_fallthru
      _
    // Predicated region
    $region22: #{forward.1} parent=1 // pred_check
      _
    $region23: #{forward.1} parent=1 // pred_check_branch
      %46 = sbr.rel (0) target = $region25
    $region24: #{forward.1} parent=1 // pred_region
      %s48 = ssub.s32 2048, 2048
      %49 = vsyncadd [#allocation6], %s48
      %s50 = sshll.u32 [#allocation7], 4
      %s51 = int_to_ptr.vmem [resolvable:$true] %s50
      %56 = dma.hbm_to_vmem [thread:$0]  %s5, 2048, %s51, [#allocation6], 128, 128, 8
    $region25: #{forward.1} parent=1 // pred_fallthru
      _
    // Predicated region
    $region26: #{forward.1} parent=1 // pred_check
      _
    $region27: #{forward.1} parent=1 // pred_check_branch
      %58 = sbr.rel (0) target = $region29
    $region28: #{forward.1} parent=1 // pred_region
      _
    $region29: #{forward.1} parent=1 // pred_fallthru
      _
    // Predicated region
    $region30: #{forward.1} parent=1 // pred_check
      _
    $region31: #{forward.1} parent=1 // pred_check_branch
      %60 = sbr.rel (0) target = $region33
    $region32: #{forward.1} parent=1 // pred_region
      %61 = dma.done [#allocation3], 2048
    $region33: #{forward.1} parent=1 // pred_fallthru
      _
    // Predicated region
    $region34: #{forward.1} parent=1 // pred_check
      _
    $region35: #{forward.1} parent=1 // pred_check_branch
      %63 = sbr.rel (0) target = $region37
    $region36: #{forward.1} parent=1 // pred_region
      %64 = dma.done [#allocation6], 2048
    $region37: #{forward.1} parent=1 // pred_fallthru
      _
    // Predicated region
    $region38: #{forward.1} parent=1 // pred_check
      _
    $region39: #{forward.1} parent=1 // pred_check_branch
      %66 = sbr.rel (0) target = $region41
    $region40: #{forward.1} parent=1 // pred_region
      %67 = dma.done [#allocation6], 2048
    $region41: #{forward.1} parent=1 // pred_fallthru
      _
    %v68 = vld [vmem:[%s0] sm:$0xff]
    %v69 = vld [vmem:[#allocation2] sm:$0xff]
    %v70 = vld [vmem:[#allocation2 + $0x8] sm:$0xff]
    %v71 = vld [vmem:[#allocation2 + $0x10] sm:$0xff]
    %v72 = vld [vmem:[#allocation2 + $0x18] sm:$0xff]
    %v73 = vld [vmem:[#allocation2 + $0x20] sm:$0xff]
    %v74 = vld [vmem:[#allocation2 + $0x28] sm:$0xff]
    %v75 = vld [vmem:[#allocation2 + $0x30] sm:$0xff]
    %v76 = vld [vmem:[#allocation2 + $0x38] sm:$0xff]
    %v77 = vld [vmem:[#allocation2 + $0x40] sm:$0xff]
    %v78 = vld [vmem:[#allocation2 + $0x48] sm:$0xff]
    %v79 = vld [vmem:[#allocation2 + $0x50] sm:$0xff]
    %v80 = vld [vmem:[#allocation2 + $0x58] sm:$0xff]
    %v81 = vld [vmem:[#allocation2 + $0x60] sm:$0xff]
    %v82 = vld [vmem:[#allocation2 + $0x68] sm:$0xff]
    %v83 = vld [vmem:[#allocation2 + $0x70] sm:$0xff]
    %v84 = vld [vmem:[#allocation2 + $0x78] sm:$0xff]
    %v85 = vld [vmem:[%s2] sm:$0x1]
    %v87 = vlaneseq
    %v88 = vshrl.u32 %v87, 7
    %v89 = vsub.s32 0, %v88
    %v90 = vrot.slane %v85, %v89
    %92 = vmatprep.subr.mxu0 0.0
    %93 = vmatpush1.msra.mxu0 %v69
    %94 = vmatprep.subr.mxu0 0.0
    %95 = vmatpush1.msra.mxu0 %v70
    %96 = vmatprep.subr.mxu0 0.0
    %97 = vmatpush1.msra.mxu0 %v71
    %98 = vmatprep.subr.mxu0 0.0
    %99 = vmatpush1.msra.mxu0 %v72
    %100 = vmatprep.subr.mxu0 0.0
    %101 = vmatpush1.msra.mxu0 %v73
    %102 = vmatprep.subr.mxu0 0.0
    %103 = vmatpush1.msra.mxu0 %v74
    %104 = vmatprep.subr.mxu0 0.0
    %105 = vmatpush1.msra.mxu0 %v75
    %106 = vmatprep.subr.mxu0 0.0
    %107 = vmatpush1.msra.mxu0 %v76
    %108 = vmatprep.subr.mxu0 0.0
    %109 = vmatpush1.msra.mxu0 %v77
    %110 = vmatprep.subr.mxu0 0.0
    %111 = vmatpush1.msra.mxu0 %v78
    %112 = vmatprep.subr.mxu0 0.0
    %113 = vmatpush1.msra.mxu0 %v79
    %114 = vmatprep.subr.mxu0 0.0
    %115 = vmatpush1.msra.mxu0 %v80
    %116 = vmatprep.subr.mxu0 0.0
    %117 = vmatpush1.msra.mxu0 %v81
    %118 = vmatprep.subr.mxu0 0.0
    %119 = vmatpush1.msra.mxu0 %v82
    %120 = vmatprep.subr.mxu0 0.0
    %121 = vmatpush1.msra.mxu0 %v83
    %122 = vmatprep.subr.mxu0 0.0
    %123 = vmatpush1.msra.mxu0 %v84
    %124 = vmatprep.subr.mxu0 0.0
    %125 = vmatpush1.msra.mxu0 0.0
    %126 = vmatprep.subr.mxu0 0.0
    %127 = vmatpush1.msra.mxu0 0.0
    %128 = vmatprep.subr.mxu0 0.0
    %129 = vmatpush1.msra.mxu0 0.0
    %130 = vmatprep.subr.mxu0 0.0
    %131 = vmatpush1.msra.mxu0 0.0
    %132 = vmatprep.subr.mxu0 0.0
    %133 = vmatpush1.msra.mxu0 0.0
    %134 = vmatprep.subr.mxu0 0.0
    %135 = vmatpush1.msra.mxu0 0.0
    %136 = vmatprep.subr.mxu0 0.0
    %137 = vmatpush1.msra.mxu0 0.0
    %138 = vmatprep.subr.mxu0 0.0
    %139 = vmatpush1.msra.mxu0 0.0
    %140 = vmatprep.subr.mxu0 0.0
    %141 = vmatpush1.msra.mxu0 0.0
    %142 = vmatprep.subr.mxu0 0.0
    %143 = vmatpush1.msra.mxu0 0.0
    %144 = vmatprep.subr.mxu0 0.0
    %145 = vmatpush1.msra.mxu0 0.0
    %146 = vmatprep.subr.mxu0 0.0
    %147 = vmatpush1.msra.mxu0 0.0
    %148 = vmatprep.subr.mxu0 0.0
    %149 = vmatpush1.msra.mxu0 0.0
    %150 = vmatprep.subr.mxu0 0.0
    %151 = vmatpush1.msra.mxu0 0.0
    %152 = vmatprep.subr.mxu0 0.0
    %153 = vmatpush1.msra.mxu0 0.0
    %154 = vmatprep.subr.mxu0 0.0
    %155 = vmatpush1.msra.mxu0 0.0
    %156 = vmatprep.mubr.f32.mxu0 0.0
    %157 = vmatmul.mubr.f32.gmra.mrb[0].mxu0 %v68
    %v158 = vpop.f32.mrb[0].mxu0
    %v159 = vadd.f32 %v90, %v158
    %v160 = vpop.f32.mrb[0].mxu0
    %161 = vdwg.mxu0
    %v162 = vmax.f32 %v159, 0.0
    %v163 = vld [vmem:[#allocation5] sm:$0xff]
    %v164 = vld [vmem:[#allocation5 + $0x8] sm:$0xff]
    %v165 = vld [vmem:[#allocation5 + $0x10] sm:$0xff]
    %v166 = vld [vmem:[#allocation5 + $0x18] sm:$0xff]
    %v167 = vld [vmem:[#allocation5 + $0x20] sm:$0xff]
    %v168 = vld [vmem:[#allocation5 + $0x28] sm:$0xff]
    %v169 = vld [vmem:[#allocation5 + $0x30] sm:$0xff]
    %v170 = vld [vmem:[#allocation5 + $0x38] sm:$0xff]
    %v171 = vld [vmem:[#allocation5 + $0x40] sm:$0xff]
    %v172 = vld [vmem:[#allocation5 + $0x48] sm:$0xff]
    %v173 = vld [vmem:[#allocation5 + $0x50] sm:$0xff]
    %v174 = vld [vmem:[#allocation5 + $0x58] sm:$0xff]
    %v175 = vld [vmem:[#allocation5 + $0x60] sm:$0xff]
    %v176 = vld [vmem:[#allocation5 + $0x68] sm:$0xff]
    %v177 = vld [vmem:[#allocation5 + $0x70] sm:$0xff]
    %v178 = vld [vmem:[#allocation5 + $0x78] sm:$0xff]
    %v179 = vld [vmem:[%s4] sm:$0x1]
    %v181 = vlaneseq
    %v182 = vshrl.u32 %v181, 7
    %v183 = vsub.s32 0, %v182
    %v184 = vrot.slane %v179, %v183
    %186 = vmatprep.subr.mxu0 0.0
    %187 = vmatpush1.msra.mxu0 %v163
    %188 = vmatprep.subr.mxu0 0.0
    %189 = vmatpush1.msra.mxu0 %v164
    %190 = vmatprep.subr.mxu0 0.0
    %191 = vmatpush1.msra.mxu0 %v165
    %192 = vmatprep.subr.mxu0 0.0
    %193 = vmatpush1.msra.mxu0 %v166
    %194 = vmatprep.subr.mxu0 0.0
    %195 = vmatpush1.msra.mxu0 %v167
    %196 = vmatprep.subr.mxu0 0.0
    %197 = vmatpush1.msra.mxu0 %v168
    %198 = vmatprep.subr.mxu0 0.0
    %199 = vmatpush1.msra.mxu0 %v169
    %200 = vmatprep.subr.mxu0 0.0
    %201 = vmatpush1.msra.mxu0 %v170
    %202 = vmatprep.subr.mxu0 0.0
    %203 = vmatpush1.msra.mxu0 %v171
    %204 = vmatprep.subr.mxu0 0.0
    %205 = vmatpush1.msra.mxu0 %v172
    %206 = vmatprep.subr.mxu0 0.0
    %207 = vmatpush1.msra.mxu0 %v173
    %208 = vmatprep.subr.mxu0 0.0
    %209 = vmatpush1.msra.mxu0 %v174
    %210 = vmatprep.subr.mxu0 0.0
    %211 = vmatpush1.msra.mxu0 %v175
    %212 = vmatprep.subr.mxu0 0.0
    %213 = vmatpush1.msra.mxu0 %v176
    %214 = vmatprep.subr.mxu0 0.0
    %215 = vmatpush1.msra.mxu0 %v177
    %216 = vmatprep.subr.mxu0 0.0
    %217 = vmatpush1.msra.mxu0 %v178
    %218 = vmatprep.subr.mxu0 0.0
    %219 = vmatpush1.msra.mxu0 0.0
    %220 = vmatprep.subr.mxu0 0.0
    %221 = vmatpush1.msra.mxu0 0.0
    %222 = vmatprep.subr.mxu0 0.0
    %223 = vmatpush1.msra.mxu0 0.0
    %224 = vmatprep.subr.mxu0 0.0
    %225 = vmatpush1.msra.mxu0 0.0
    %226 = vmatprep.subr.mxu0 0.0
    %227 = vmatpush1.msra.mxu0 0.0
    %228 = vmatprep.subr.mxu0 0.0
    %229 = vmatpush1.msra.mxu0 0.0
    %230 = vmatprep.subr.mxu0 0.0
    %231 = vmatpush1.msra.mxu0 0.0
    %232 = vmatprep.subr.mxu0 0.0
    %233 = vmatpush1.msra.mxu0 0.0
    %234 = vmatprep.subr.mxu0 0.0
    %235 = vmatpush1.msra.mxu0 0.0
    %236 = vmatprep.subr.mxu0 0.0
    %237 = vmatpush1.msra.mxu0 0.0
    %238 = vmatprep.subr.mxu0 0.0
    %239 = vmatpush1.msra.mxu0 0.0
    %240 = vmatprep.subr.mxu0 0.0
    %241 = vmatpush1.msra.mxu0 0.0
    %242 = vmatprep.subr.mxu0 0.0
    %243 = vmatpush1.msra.mxu0 0.0
    %244 = vmatprep.subr.mxu0 0.0
    %245 = vmatpush1.msra.mxu0 0.0
    %246 = vmatprep.subr.mxu0 0.0
    %247 = vmatpush1.msra.mxu0 0.0
    %248 = vmatprep.subr.mxu0 0.0
    %249 = vmatpush1.msra.mxu0 0.0
    %250 = vmatprep.mubr.f32.mxu0 0.0
    %251 = vmatmul.mubr.f32.gmra.mrb[0].mxu0 %v162
    %v252 = vpop.f32.mrb[0].mxu0
    %v253 = vadd.f32 %v184, %v252
    %v254 = vpop.f32.mrb[0].mxu0
    %255 = vdwg.mxu0
    %v256 = vmax.f32 %v253, 0.0
    %v257 = vld [vmem:[#allocation7] sm:$0xff]
    %v258 = vld [vmem:[#allocation7 + $0x8] sm:$0xff]
    %v259 = vld [vmem:[#allocation7 + $0x10] sm:$0xff]
    %v260 = vld [vmem:[#allocation7 + $0x18] sm:$0xff]
    %v261 = vld [vmem:[#allocation7 + $0x20] sm:$0xff]
    %v262 = vld [vmem:[#allocation7 + $0x28] sm:$0xff]
    %v263 = vld [vmem:[#allocation7 + $0x30] sm:$0xff]
    %v264 = vld [vmem:[#allocation7 + $0x38] sm:$0xff]
    %v265 = vld [vmem:[#allocation7 + $0x40] sm:$0xff]
    %v266 = vld [vmem:[#allocation7 + $0x48] sm:$0xff]
    %v267 = vld [vmem:[#allocation7 + $0x50] sm:$0xff]
    %v268 = vld [vmem:[#allocation7 + $0x58] sm:$0xff]
    %v269 = vld [vmem:[#allocation7 + $0x60] sm:$0xff]
    %v270 = vld [vmem:[#allocation7 + $0x68] sm:$0xff]
    %v271 = vld [vmem:[#allocation7 + $0x70] sm:$0xff]
    %v272 = vld [vmem:[#allocation7 + $0x78] sm:$0xff]
    %v273 = vld [vmem:[%s6] sm:$0x1]
    %v275 = vlaneseq
    %v276 = vshrl.u32 %v275, 7
    %v277 = vsub.s32 0, %v276
    %v278 = vrot.slane %v273, %v277
    %280 = vmatprep.subr.mxu0 0.0
    %281 = vmatpush1.msra.mxu0 %v257
    %282 = vmatprep.subr.mxu0 0.0
    %283 = vmatpush1.msra.mxu0 %v258
    %284 = vmatprep.subr.mxu0 0.0
    %285 = vmatpush1.msra.mxu0 %v259
    %286 = vmatprep.subr.mxu0 0.0
    %287 = vmatpush1.msra.mxu0 %v260
    %288 = vmatprep.subr.mxu0 0.0
    %289 = vmatpush1.msra.mxu0 %v261
    %290 = vmatprep.subr.mxu0 0.0
    %291 = vmatpush1.msra.mxu0 %v262
    %292 = vmatprep.subr.mxu0 0.0
    %293 = vmatpush1.msra.mxu0 %v263
    %294 = vmatprep.subr.mxu0 0.0
    %295 = vmatpush1.msra.mxu0 %v264
    %296 = vmatprep.subr.mxu0 0.0
    %297 = vmatpush1.msra.mxu0 %v265
    %298 = vmatprep.subr.mxu0 0.0
    %299 = vmatpush1.msra.mxu0 %v266
    %300 = vmatprep.subr.mxu0 0.0
    %301 = vmatpush1.msra.mxu0 %v267
    %302 = vmatprep.subr.mxu0 0.0
    %303 = vmatpush1.msra.mxu0 %v268
    %304 = vmatprep.subr.mxu0 0.0
    %305 = vmatpush1.msra.mxu0 %v269
    %306 = vmatprep.subr.mxu0 0.0
    %307 = vmatpush1.msra.mxu0 %v270
    %308 = vmatprep.subr.mxu0 0.0
    %309 = vmatpush1.msra.mxu0 %v271
    %310 = vmatprep.subr.mxu0 0.0
    %311 = vmatpush1.msra.mxu0 %v272
    %312 = vmatprep.subr.mxu0 0.0
    %313 = vmatpush1.msra.mxu0 0.0
    %314 = vmatprep.subr.mxu0 0.0
    %315 = vmatpush1.msra.mxu0 0.0
    %316 = vmatprep.subr.mxu0 0.0
    %317 = vmatpush1.msra.mxu0 0.0
    %318 = vmatprep.subr.mxu0 0.0
    %319 = vmatpush1.msra.mxu0 0.0
    %320 = vmatprep.subr.mxu0 0.0
    %321 = vmatpush1.msra.mxu0 0.0
    %322 = vmatprep.subr.mxu0 0.0
    %323 = vmatpush1.msra.mxu0 0.0
    %324 = vmatprep.subr.mxu0 0.0
    %325 = vmatpush1.msra.mxu0 0.0
    %326 = vmatprep.subr.mxu0 0.0
    %327 = vmatpush1.msra.mxu0 0.0
    %328 = vmatprep.subr.mxu0 0.0
    %329 = vmatpush1.msra.mxu0 0.0
    %330 = vmatprep.subr.mxu0 0.0
    %331 = vmatpush1.msra.mxu0 0.0
    %332 = vmatprep.subr.mxu0 0.0
    %333 = vmatpush1.msra.mxu0 0.0
    %334 = vmatprep.subr.mxu0 0.0
    %335 = vmatpush1.msra.mxu0 0.0
    %336 = vmatprep.subr.mxu0 0.0
    %337 = vmatpush1.msra.mxu0 0.0
    %338 = vmatprep.subr.mxu0 0.0
    %339 = vmatpush1.msra.mxu0 0.0
    %340 = vmatprep.subr.mxu0 0.0
    %341 = vmatpush1.msra.mxu0 0.0
    %342 = vmatprep.subr.mxu0 0.0
    %343 = vmatpush1.msra.mxu0 0.0
    %344 = vmatprep.mubr.f32.mxu0 0.0
    %345 = vmatmul.mubr.f32.gmra.mrb[0].mxu0 %v256
    %v346 = vpop.f32.mrb[0].mxu0
    %v347 = vadd.f32 %v278, %v346
    %v348 = vpop.f32.mrb[0].mxu0
    %349 = vdwg.mxu0
    %350 = vst [vmem:[#allocation8] sm:$0xff] %v347
    // Predicated region
    $region42: #{forward.1} parent=1 // pred_check
      _
    $region43: #{forward.1} parent=1 // pred_check_branch
      %352 = sbr.rel (0) target = $region45
    $region44: #{forward.1} parent=1 // pred_region
      %s354 = ssub.s32 128, 128
      %355 = vsyncadd [#allocation4], %s354
      %s357 = sshll.u32 [#allocation8], 4
      %s358 = int_to_ptr.vmem [resolvable:$true] %s357
      %360 = dma.vmem_to_hbm [thread:$0]  %s358, 128, %s7, [#allocation4]
    $region45: #{forward.1} parent=1 // pred_fallthru
      _
    // Predicated region
    $region46: #{forward.1} parent=1 // pred_check
      _
    $region47: #{forward.1} parent=1 // pred_check_branch
      %362 = sbr.rel (0) target = $region49
    $region48: #{forward.1} parent=1 // pred_region
      %363 = dma.done [#allocation4], 128
    $region49: #{forward.1} parent=1 // pred_fallthru
      _
    %364 = vsyncpa [#allocation3], 1
    %365 = vsyncpa [#allocation6], 1
    %366 = vsyncpa [#allocation4], 1

</llo_original>
